<compile_context>
chip_gen: v7x
topology: tpu7x:2x2x1
jax: 0.10.0
libtpu: 0.0.40
codegen_flags: <defaults>
</compile_context>

<pallas_src>
import math

import jax
import jax.numpy as jnp
from jax.experimental import pallas as pl
from jax.experimental.pallas import tpu as pltpu

_LANES = 128
_FOUR_OVER_PI_SQ = 4.0 / (math.pi * math.pi)


def _round_up(x, m):
    return ((x + m - 1) // m) * m


def _atan(x):
    # arctan from guaranteed-lowerable primitives only (mul/add/div/sqrt):
    # 3x argument halving  atan(x) = 2 * atan(x / (1 + sqrt(1 + x^2)))
    # then a degree-9 odd Taylor polynomial (|y| <= tan(pi/16) ~ 0.199,
    # truncation error < 2e-8).
    y = x
    for _ in range(3):
        y = y / (1.0 + jnp.sqrt(1.0 + y * y))
    y2 = y * y
    p = y * (1.0 + y2 * (-1.0 / 3.0
                         + y2 * (1.0 / 5.0
                                 + y2 * (-1.0 / 7.0 + y2 * (1.0 / 9.0)))))
    return 8.0 * p


def _ciou_kernel(n_ref, pred_ref, tgt_ref, loss_ref, sdiou_ref):
    # n_ref: SMEM (1,) int32 (scalar prefetch)
    # pred_ref / tgt_ref: VMEM blocks (4, block_rows, 128)  [x, y, w, h slabs]
    # loss_ref: (1, 1) f32 output (resident across the grid)
    # sdiou_ref: (1, 1) f32 VMEM scratch (DIoU scalar sum)
    phase = pl.program_id(0)
    tile = pl.program_id(1)
    block_rows = pred_ref.shape[1]
    lanes = pred_ref.shape[2]

    @pl.when(jnp.logical_and(phase == 0, tile == 0))
    def _init():
        sdiou_ref[...] = jnp.zeros_like(sdiou_ref)
        loss_ref[...] = jnp.zeros_like(loss_ref)

    xo, yo, wo, ho = pred_ref[0], pred_ref[1], pred_ref[2], pred_ref[3]
    xt, yt, wt, ht = tgt_ref[0], tgt_ref[1], tgt_ref[2], tgt_ref[3]

    x_max = jnp.maximum(xo + wo * 0.5, xt + wt * 0.5)
    x_min = jnp.minimum(xo - wo * 0.5, xt - wt * 0.5)
    y_max = jnp.maximum(yo + ho * 0.5, yt + ht * 0.5)
    y_min = jnp.minimum(yo - ho * 0.5, yt - ht * 0.5)

    inter = (wo + wt - (x_max - x_min)) * (ho + ht - (y_max - y_min))
    inter = jnp.maximum(inter, 0.0)
    union = wo * ho + wt * ht - inter
    iou = inter / union

    # Validity mask from the scalar-prefetched box count; padded lanes (which
    # may carry NaN from 0/0) are zeroed before any reduction.
    base = tile * (block_rows * lanes)
    row_ids = jax.lax.broadcasted_iota(jnp.int32, (block_rows, lanes), 0)
    lane_ids = jax.lax.broadcasted_iota(jnp.int32, (block_rows, lanes), 1)
    valid = (base + row_ids * lanes + lane_ids) < n_ref[0]

    @pl.when(phase == 0)
    def _diou_pass():
        c = (x_max - x_min) * (y_max - y_min)
        dx = xo - xt
        dy = yo - yt
        r_diou = (dx * dx + dy * dy) / (c * c)
        per_box = jnp.maximum(1.0 - iou + r_diou, 0.0)
        per_box = jnp.where(valid, per_box, 0.0)
        sdiou_ref[...] += jnp.sum(per_box, keepdims=True)

    @pl.when(phase == 1)
    def _ciou_pass():
        da = _atan(wt / ht) - _atan(wo / ho)
        v = da * da * _FOUR_OVER_PI_SQ
        alpha = v / (1.0 + v - iou)
        r_ciou = alpha * v
        per_box = jnp.maximum(sdiou_ref[...] + r_ciou, 0.0)  # (1,1) broadcast
        per_box = jnp.where(valid, per_box, 0.0)
        loss_ref[...] += jnp.sum(per_box, keepdims=True)


def ciou_loss_pallas(outputs, targets, *, max_block_rows=512):
    """outputs, targets: [N, 4] float32 boxes in (cx, cy, w, h) format."""
    n = outputs.shape[0]
    rows_needed = max(1, -(-n // _LANES))
    block_rows = min(_round_up(max_block_rows, 8), _round_up(rows_needed, 8))
    total_rows = _round_up(rows_needed, block_rows)
    n_tiles = total_rows // block_rows
    n_pad = total_rows * _LANES

    # TODO(synk): the coordinate-major restructure (transpose+pad) is done in
    # the wrapper; callers that already store boxes coordinate-major can feed
    # the (4, rows, 128) slabs directly and skip this extra HBM pass.
    def to_slab(x):
        xt = jnp.transpose(x.astype(jnp.float32))            # (4, N)
        xt = jnp.pad(xt, ((0, 0), (0, n_pad - n)))            # (4, n_pad)
        return xt.reshape(4, total_rows, _LANES)

    pred_slab = to_slab(outputs)
    tgt_slab = to_slab(targets)
    n_arr = jnp.array([n], dtype=jnp.int32)

    grid_spec = pltpu.PrefetchScalarGridSpec(
        num_scalar_prefetch=1,
        grid=(2, n_tiles),
        in_specs=[
            pl.BlockSpec((4, block_rows, _LANES), lambda p, t, n_sm: (0, t, 0)),
            pl.BlockSpec((4, block_rows, _LANES), lambda p, t, n_sm: (0, t, 0)),
        ],
        out_specs=pl.BlockSpec((1, 1), lambda p, t, n_sm: (0, 0)),
        scratch_shapes=[pltpu.VMEM((1, 1), jnp.float32)],
    )

    loss = pl.pallas_call(
        _ciou_kernel,
        out_shape=jax.ShapeDtypeStruct((1, 1), jnp.float32),
        grid_spec=grid_spec,
        compiler_params=pltpu.CompilerParams(
            dimension_semantics=("arbitrary", "arbitrary")),
    )(n_arr, pred_slab, tgt_slab)
    return loss[0, 0]


def ciou_loss_ref(outputs, targets):
    """Pure-JAX reference mirroring the PyTorch CIoU_loss module exactly."""
    xo, yo, wo, ho = outputs[:, 0], outputs[:, 1], outputs[:, 2], outputs[:, 3]
    xt, yt, wt, ht = targets[:, 0], targets[:, 1], targets[:, 2], targets[:, 3]
    x_max = jnp.maximum(xo + wo / 2, xt + wt / 2)
    x_min = jnp.minimum(xo - wo / 2, xt - wt / 2)
    y_max = jnp.maximum(yo + ho / 2, yt + ht / 2)
    y_min = jnp.minimum(yo - ho / 2, yt - ht / 2)
    inter = (wo + wt - (x_max - x_min)) * (ho + ht - (y_max - y_min))
    inter = jnp.where(inter < 0, 0.0, inter)
    union = wo * ho + wt * ht - inter
    iou = inter / union
    # DIoU_loss (scalar)
    c = (x_max - x_min) * (y_max - y_min)
    dis = (xo - xt) ** 2 + (yo - yt) ** 2
    r_diou = dis / (c * c)
    diou = jnp.sum(jnp.maximum(1.0 - iou + r_diou, 0.0))
    # CIoU penalty, broadcast of the scalar DIoU sum (as in the PyTorch code)
    v = (jnp.arctan(wt / ht) - jnp.arctan(wo / ho)) ** 2 * _FOUR_OVER_PI_SQ
    alpha = v / (1.0 + v - iou)
    r_ciou = alpha * v
    return jnp.sum(jnp.maximum(diou + r_ciou, 0.0))


def ciou_loss(outputs, targets, *, min_boxes_for_pallas=1024):
    """Dispatch: tiny N stays in plain JAX (kernel launch not worth it)."""
    if outputs.shape[0] < min_boxes_for_pallas:
        return ciou_loss_ref(outputs, targets)
    return ciou_loss_pallas(outputs, targets)


if __name__ == "__main__":
    key = jax.random.PRNGKey(0)
    k1, k2, k3, k4 = jax.random.split(key, 4)
    N = 2000  # boxes; non-multiple of 128 to exercise in-kernel masking

    out_xy = jax.random.uniform(k1, (N, 2), jnp.float32, 0.0, 10.0)
    out_wh = jax.random.uniform(k2, (N, 2), jnp.float32, 0.5, 3.0)
    tgt_xy = jax.random.uniform(k3, (N, 2), jnp.float32, 0.0, 10.0)
    tgt_wh = jax.random.uniform(k4, (N, 2), jnp.float32, 0.5, 3.0)
    outputs = jnp.concatenate([out_xy, out_wh], axis=1)   # (N, 4)
    targets = jnp.concatenate([tgt_xy, tgt_wh], axis=1)   # (N, 4)

    # small max_block_rows so the test exercises multi-tile accumulation
    got = jax.block_until_ready(
        ciou_loss_pallas(outputs, targets, max_block_rows=8))
    want = jax.block_until_ready(ciou_loss_ref(outputs, targets))
    assert jnp.allclose(got, want, rtol=1e-4, atol=1e-2), (got, want)
    print("KERNEL_OK")
</pallas_src>

<mosaic_0001>
module attributes {stable_mosaic.version = 11 : i64} {
  func.func @_ciou_kernel(%arg0: i32, %arg1: i32, %arg2: memref<1xi32, #tpu.memory_space<smem>>, %arg3: memref<4x8x128xf32, #tpu.memory_space<vmem>>, %arg4: memref<4x8x128xf32, #tpu.memory_space<vmem>>, %arg5: memref<1x1xf32, #tpu.memory_space<vmem>>, %arg6: memref<1x1xf32, #tpu.memory_space<vmem>>) attributes {dimension_semantics = [#tpu.dimension_semantics<arbitrary>, #tpu.dimension_semantics<arbitrary>], iteration_bounds = array<i64: 2, 2>, scalar_prefetch = 1 : i64, scratch_operands = 1 : i64, tpu.core_type = #tpu.core_type<tc>, window_params = [{transform_indices = @transform_0, window_bounds = array<i64: 4, 8, 128>}, {transform_indices = @transform_1, window_bounds = array<i64: 4, 8, 128>}, {pipeline_mode = #tpu.pipeline_mode<synchronous>, transform_indices = @transform_2, window_bounds = array<i64: 1, 1>}]} {
    %c0_i32 = arith.constant 0 : i32
    %0 = arith.cmpi eq, %arg0, %c0_i32 : i32
    %c0_i32_0 = arith.constant 0 : i32
    %1 = arith.cmpi eq, %arg1, %c0_i32_0 : i32
    %2 = arith.andi %0, %1 : i1
    %3 = arith.extui %2 : i1 to i32
    %c0_i32_1 = arith.constant 0 : i32
    %4 = arith.cmpi ne, %3, %c0_i32_1 : i32
    scf.if %4 {
      %cst_34 = arith.constant 0.000000e+00 : f32
      %80 = vector.broadcast %cst_34 : f32 to vector<1x1xf32>
      %c0_35 = arith.constant 0 : index
      %c0_36 = arith.constant 0 : index
      %81 = vector.load %arg6[%c0_35, %c0_36] : memref<1x1xf32, #tpu.memory_space<vmem>>, vector<1x1xf32>
      tpu.vector_store %arg6[%c0_35, %c0_36], %80 {strides = array<i32>} : memref<1x1xf32, #tpu.memory_space<vmem>>, vector<1x1xf32>,
      %cst_37 = arith.constant 0.000000e+00 : f32
      %82 = vector.broadcast %cst_37 : f32 to vector<1x1xf32>
      %c0_38 = arith.constant 0 : index
      %c0_39 = arith.constant 0 : index
      %83 = vector.load %arg5[%c0_38, %c0_39] : memref<1x1xf32, #tpu.memory_space<vmem>>, vector<1x1xf32>
      tpu.vector_store %arg5[%c0_38, %c0_39], %82 {strides = array<i32>} : memref<1x1xf32, #tpu.memory_space<vmem>>, vector<1x1xf32>,
    } else {
    }
    %c0 = arith.constant 0 : index
    %c0_2 = arith.constant 0 : index
    %c0_3 = arith.constant 0 : index
    %5 = vector.load %arg3[%c0, %c0_2, %c0_3] : memref<4x8x128xf32, #tpu.memory_space<vmem>>, vector<1x8x128xf32>
    %6 = vector.shape_cast %5 : vector<1x8x128xf32> to vector<8x128xf32>
    %c1 = arith.constant 1 : index
    %c0_4 = arith.constant 0 : index
    %c0_5 = arith.constant 0 : index
    %7 = vector.load %arg3[%c1, %c0_4, %c0_5] : memref<4x8x128xf32, #tpu.memory_space<vmem>>, vector<1x8x128xf32>
    %8 = vector.shape_cast %7 : vector<1x8x128xf32> to vector<8x128xf32>
    %c2 = arith.constant 2 : index
    %c0_6 = arith.constant 0 : index
    %c0_7 = arith.constant 0 : index
    %9 = vector.load %arg3[%c2, %c0_6, %c0_7] : memref<4x8x128xf32, #tpu.memory_space<vmem>>, vector<1x8x128xf32>
    %10 = vector.shape_cast %9 : vector<1x8x128xf32> to vector<8x128xf32>
    %c3 = arith.constant 3 : index
    %c0_8 = arith.constant 0 : index
    %c0_9 = arith.constant 0 : index
    %11 = vector.load %arg3[%c3, %c0_8, %c0_9] : memref<4x8x128xf32, #tpu.memory_space<vmem>>, vector<1x8x128xf32>
    %12 = vector.shape_cast %11 : vector<1x8x128xf32> to vector<8x128xf32>
    %c0_10 = arith.constant 0 : index
    %c0_11 = arith.constant 0 : index
    %c0_12 = arith.constant 0 : index
    %13 = vector.load %arg4[%c0_10, %c0_11, %c0_12] : memref<4x8x128xf32, #tpu.memory_space<vmem>>, vector<1x8x128xf32>
    %14 = vector.shape_cast %13 : vector<1x8x128xf32> to vector<8x128xf32>
    %c1_13 = arith.constant 1 : index
    %c0_14 = arith.constant 0 : index
    %c0_15 = arith.constant 0 : index
    %15 = vector.load %arg4[%c1_13, %c0_14, %c0_15] : memref<4x8x128xf32, #tpu.memory_space<vmem>>, vector<1x8x128xf32>
    %16 = vector.shape_cast %15 : vector<1x8x128xf32> to vector<8x128xf32>
    %c2_16 = arith.constant 2 : index
    %c0_17 = arith.constant 0 : index
    %c0_18 = arith.constant 0 : index
    %17 = vector.load %arg4[%c2_16, %c0_17, %c0_18] : memref<4x8x128xf32, #tpu.memory_space<vmem>>, vector<1x8x128xf32>
    %18 = vector.shape_cast %17 : vector<1x8x128xf32> to vector<8x128xf32>
    %c3_19 = arith.constant 3 : index
    %c0_20 = arith.constant 0 : index
    %c0_21 = arith.constant 0 : index
    %19 = vector.load %arg4[%c3_19, %c0_20, %c0_21] : memref<4x8x128xf32, #tpu.memory_space<vmem>>, vector<1x8x128xf32>
    %20 = vector.shape_cast %19 : vector<1x8x128xf32> to vector<8x128xf32>
    %cst = arith.constant 5.000000e-01 : f32
    %21 = vector.broadcast %cst : f32 to vector<8x128xf32>
    %22 = arith.mulf %10, %21 : vector<8x128xf32>
    %23 = arith.addf %6, %22 : vector<8x128xf32>
    %cst_22 = arith.constant 5.000000e-01 : f32
    %24 = vector.broadcast %cst_22 : f32 to vector<8x128xf32>
    %25 = arith.mulf %18, %24 : vector<8x128xf32>
    %26 = arith.addf %14, %25 : vector<8x128xf32>
    %27 = arith.maximumf %23, %26 : vector<8x128xf32>
    %cst_23 = arith.constant 5.000000e-01 : f32
    %28 = vector.broadcast %cst_23 : f32 to vector<8x128xf32>
    %29 = arith.mulf %10, %28 : vector<8x128xf32>
    %30 = arith.subf %6, %29 : vector<8x128xf32>
    %cst_24 = arith.constant 5.000000e-01 : f32
    %31 = vector.broadcast %cst_24 : f32 to vector<8x128xf32>
    %32 = arith.mulf %18, %31 : vector<8x128xf32>
    %33 = arith.subf %14, %32 : vector<8x128xf32>
    %34 = arith.minimumf %30, %33 : vector<8x128xf32>
    %cst_25 = arith.constant 5.000000e-01 : f32
    %35 = vector.broadcast %cst_25 : f32 to vector<8x128xf32>
    %36 = arith.mulf %12, %35 : vector<8x128xf32>
    %37 = arith.addf %8, %36 : vector<8x128xf32>
    %cst_26 = arith.constant 5.000000e-01 : f32
    %38 = vector.broadcast %cst_26 : f32 to vector<8x128xf32>
    %39 = arith.mulf %20, %38 : vector<8x128xf32>
    %40 = arith.addf %16, %39 : vector<8x128xf32>
    %41 = arith.maximumf %37, %40 : vector<8x128xf32>
    %cst_27 = arith.constant 5.000000e-01 : f32
    %42 = vector.broadcast %cst_27 : f32 to vector<8x128xf32>
    %43 = arith.mulf %12, %42 : vector<8x128xf32>
    %44 = arith.subf %8, %43 : vector<8x128xf32>
    %cst_28 = arith.constant 5.000000e-01 : f32
    %45 = vector.broadcast %cst_28 : f32 to vector<8x128xf32>
    %46 = arith.mulf %20, %45 : vector<8x128xf32>
    %47 = arith.subf %16, %46 : vector<8x128xf32>
    %48 = arith.minimumf %44, %47 : vector<8x128xf32>
    %49 = arith.addf %10, %18 : vector<8x128xf32>
    %50 = arith.subf %27, %34 : vector<8x128xf32>
    %51 = arith.subf %49, %50 : vector<8x128xf32>
    %52 = arith.addf %12, %20 : vector<8x128xf32>
    %53 = arith.subf %41, %48 : vector<8x128xf32>
    %54 = arith.subf %52, %53 : vector<8x128xf32>
    %55 = arith.mulf %51, %54 : vector<8x128xf32>
    %cst_29 = arith.constant 0.000000e+00 : f32
    %56 = vector.broadcast %cst_29 : f32 to vector<8x128xf32>
    %57 = arith.maximumf %55, %56 : vector<8x128xf32>
    %58 = arith.mulf %10, %12 : vector<8x128xf32>
    %59 = arith.mulf %18, %20 : vector<8x128xf32>
    %60 = arith.addf %58, %59 : vector<8x128xf32>
    %61 = arith.subf %60, %57 : vector<8x128xf32>
    %62 = arith.divf %57, %61 : vector<8x128xf32>
    %c1024_i32 = arith.constant 1024 : i32
    %63 = arith.muli %arg1, %c1024_i32 : i32
    %64 = tpu.iota {dimensions = array<i32: 0>} : vector<8x128xi32>
    %65 = tpu.iota {dimensions = array<i32: 1>} : vector<8x128xi32>
    %c128_i32 = arith.constant 128 : i32
    %66 = vector.broadcast %c128_i32 : i32 to vector<8x128xi32>
    %67 = arith.muli %64, %66 : vector<8x128xi32>
    %68 = vector.broadcast %63 : i32 to vector<8x128xi32>
    %69 = arith.addi %68, %67 : vector<8x128xi32>
    %70 = arith.addi %69, %65 : vector<8x128xi32>
    %c0_30 = arith.constant 0 : index
    %71 = memref.load %arg2[%c0_30] : memref<1xi32, #tpu.memory_space<smem>>
    %72 = vector.broadcast %71 : i32 to vector<8x128xi32>
    %73 = arith.cmpi slt, %70, %72 : vector<8x128xi32>
    %c0_i32_31 = arith.constant 0 : i32
    %74 = arith.cmpi eq, %arg0, %c0_i32_31 : i32
    %75 = arith.extui %74 : i1 to i32
    %c0_i32_32 = arith.constant 0 : i32
    %76 = arith.cmpi ne, %75, %c0_i32_32 : i32
    scf.if %76 {
      %80 = arith.subf %27, %34 : vector<8x128xf32>
      %81 = arith.subf %41, %48 : vector<8x128xf32>
      %82 = arith.mulf %80, %81 : vector<8x128xf32>
      %83 = arith.subf %6, %14 : vector<8x128xf32>
      %84 = arith.subf %8, %16 : vector<8x128xf32>
      %85 = arith.mulf %83, %83 : vector<8x128xf32>
      %86 = arith.mulf %84, %84 : vector<8x128xf32>
      %87 = arith.addf %85, %86 : vector<8x128xf32>
      %88 = arith.mulf %82, %82 : vector<8x128xf32>
      %89 = arith.divf %87, %88 : vector<8x128xf32>
      %cst_34 = arith.constant 1.000000e+00 : f32
      %90 = vector.broadcast %cst_34 : f32 to vector<8x128xf32>
      %91 = arith.subf %90, %62 : vector<8x128xf32>
      %92 = arith.addf %91, %89 : vector<8x128xf32>
      %cst_35 = arith.constant 0.000000e+00 : f32
      %93 = vector.broadcast %cst_35 : f32 to vector<8x128xf32>
      %94 = arith.maximumf %92, %93 : vector<8x128xf32>
      %cst_36 = arith.constant 0.000000e+00 : f32
      %95 = vector.broadcast %cst_36 : f32 to vector<8x128xf32>
      %96 = arith.select %73, %94, %95 : vector<8x128xi1>, vector<8x128xf32>
      %c0_37 = arith.constant 0 : index
      %c0_38 = arith.constant 0 : index
      %97 = vector.load %arg6[%c0_37, %c0_38] : memref<1x1xf32, #tpu.memory_space<vmem>>, vector<1x1xf32>
      %98 = vector.shape_cast %96 : vector<8x128xf32> to vector<1x8x128xf32>
      %cst_39 = arith.constant dense<0.000000e+00> : vector<1xf32>
      %99 = vector.multi_reduction <add>, %98, %cst_39 [1, 2] : vector<1x8x128xf32> to vector<1xf32>
      %100 = vector.shape_cast %99 : vector<1xf32> to vector<1x1x1xf32>
      %101 = vector.extract %100[0, 0, 0] : f32 from vector<1x1x1xf32>
      %102 = vector.broadcast %101 : f32 to vector<1x1xf32>
      %103 = arith.addf %97, %102 : vector<1x1xf32>
      %c0_40 = arith.constant 0 : index
      %c0_41 = arith.constant 0 : index
      %104 = vector.load %arg6[%c0_40, %c0_41] : memref<1x1xf32, #tpu.memory_space<vmem>>, vector<1x1xf32>
      tpu.vector_store %arg6[%c0_40, %c0_41], %103 {strides = array<i32>} : memref<1x1xf32, #tpu.memory_space<vmem>>, vector<1x1xf32>,
    } else {
    }
    %c1_i32 = arith.constant 1 : i32
    %77 = arith.cmpi eq, %arg0, %c1_i32 : i32
    %78 = arith.extui %77 : i1 to i32
    %c0_i32_33 = arith.constant 0 : i32
    %79 = arith.cmpi ne, %78, %c0_i32_33 : i32
    scf.if %79 {
      %80 = arith.divf %18, %20 : vector<8x128xf32>
      %81 = arith.mulf %80, %80 : vector<8x128xf32>
      %cst_34 = arith.constant 1.000000e+00 : f32
      %82 = vector.broadcast %cst_34 : f32 to vector<8x128xf32>
      %83 = arith.addf %82, %81 : vector<8x128xf32>
      %84 = math.sqrt %83 : vector<8x128xf32>
      %cst_35 = arith.constant 1.000000e+00 : f32
      %85 = vector.broadcast %cst_35 : f32 to vector<8x128xf32>
      %86 = arith.addf %85, %84 : vector<8x128xf32>
      %87 = arith.divf %80, %86 : vector<8x128xf32>
      %88 = arith.mulf %87, %87 : vector<8x128xf32>
      %cst_36 = arith.constant 1.000000e+00 : f32
      %89 = vector.broadcast %cst_36 : f32 to vector<8x128xf32>
      %90 = arith.addf %89, %88 : vector<8x128xf32>
      %91 = math.sqrt %90 : vector<8x128xf32>
      %cst_37 = arith.constant 1.000000e+00 : f32
      %92 = vector.broadcast %cst_37 : f32 to vector<8x128xf32>
      %93 = arith.addf %92, %91 : vector<8x128xf32>
      %94 = arith.divf %87, %93 : vector<8x128xf32>
      %95 = arith.mulf %94, %94 : vector<8x128xf32>
      %cst_38 = arith.constant 1.000000e+00 : f32
      %96 = vector.broadcast %cst_38 : f32 to vector<8x128xf32>
      %97 = arith.addf %96, %95 : vector<8x128xf32>
      %98 = math.sqrt %97 : vector<8x128xf32>
      %cst_39 = arith.constant 1.000000e+00 : f32
      %99 = vector.broadcast %cst_39 : f32 to vector<8x128xf32>
      %100 = arith.addf %99, %98 : vector<8x128xf32>
      %101 = arith.divf %94, %100 : vector<8x128xf32>
      %102 = arith.mulf %101, %101 : vector<8x128xf32>
      %cst_40 = arith.constant 0.111111112 : f32
      %103 = vector.broadcast %cst_40 : f32 to vector<8x128xf32>
      %104 = arith.mulf %102, %103 : vector<8x128xf32>
      %cst_41 = arith.constant -0.142857149 : f32
      %105 = vector.broadcast %cst_41 : f32 to vector<8x128xf32>
      %106 = arith.addf %105, %104 : vector<8x128xf32>
      %107 = arith.mulf %102, %106 : vector<8x128xf32>
      %cst_42 = arith.constant 2.000000e-01 : f32
      %108 = vector.broadcast %cst_42 : f32 to vector<8x128xf32>
      %109 = arith.addf %108, %107 : vector<8x128xf32>
      %110 = arith.mulf %102, %109 : vector<8x128xf32>
      %cst_43 = arith.constant -0.333333343 : f32
      %111 = vector.broadcast %cst_43 : f32 to vector<8x128xf32>
      %112 = arith.addf %111, %110 : vector<8x128xf32>
      %113 = arith.mulf %102, %112 : vector<8x128xf32>
      %cst_44 = arith.constant 1.000000e+00 : f32
      %114 = vector.broadcast %cst_44 : f32 to vector<8x128xf32>
      %115 = arith.addf %114, %113 : vector<8x128xf32>
      %116 = arith.mulf %101, %115 : vector<8x128xf32>
      %cst_45 = arith.constant 8.000000e+00 : f32
      %117 = vector.broadcast %cst_45 : f32 to vector<8x128xf32>
      %118 = arith.mulf %117, %116 : vector<8x128xf32>
      %119 = arith.divf %10, %12 : vector<8x128xf32>
      %120 = arith.mulf %119, %119 : vector<8x128xf32>
      %cst_46 = arith.constant 1.000000e+00 : f32
      %121 = vector.broadcast %cst_46 : f32 to vector<8x128xf32>
      %122 = arith.addf %121, %120 : vector<8x128xf32>
      %123 = math.sqrt %122 : vector<8x128xf32>
      %cst_47 = arith.constant 1.000000e+00 : f32
      %124 = vector.broadcast %cst_47 : f32 to vector<8x128xf32>
      %125 = arith.addf %124, %123 : vector<8x128xf32>
      %126 = arith.divf %119, %125 : vector<8x128xf32>
      %127 = arith.mulf %126, %126 : vector<8x128xf32>
      %cst_48 = arith.constant 1.000000e+00 : f32
      %128 = vector.broadcast %cst_48 : f32 to vector<8x128xf32>
      %129 = arith.addf %128, %127 : vector<8x128xf32>
      %130 = math.sqrt %129 : vector<8x128xf32>
      %cst_49 = arith.constant 1.000000e+00 : f32
      %131 = vector.broadcast %cst_49 : f32 to vector<8x128xf32>
      %132 = arith.addf %131, %130 : vector<8x128xf32>
      %133 = arith.divf %126, %132 : vector<8x128xf32>
      %134 = arith.mulf %133, %133 : vector<8x128xf32>
      %cst_50 = arith.constant 1.000000e+00 : f32
      %135 = vector.broadcast %cst_50 : f32 to vector<8x128xf32>
      %136 = arith.addf %135, %134 : vector<8x128xf32>
      %137 = math.sqrt %136 : vector<8x128xf32>
      %cst_51 = arith.constant 1.000000e+00 : f32
      %138 = vector.broadcast %cst_51 : f32 to vector<8x128xf32>
      %139 = arith.addf %138, %137 : vector<8x128xf32>
      %140 = arith.divf %133, %139 : vector<8x128xf32>
      %141 = arith.mulf %140, %140 : vector<8x128xf32>
      %cst_52 = arith.constant 0.111111112 : f32
      %142 = vector.broadcast %cst_52 : f32 to vector<8x128xf32>
      %143 = arith.mulf %141, %142 : vector<8x128xf32>
      %cst_53 = arith.constant -0.142857149 : f32
      %144 = vector.broadcast %cst_53 : f32 to vector<8x128xf32>
      %145 = arith.addf %144, %143 : vector<8x128xf32>
      %146 = arith.mulf %141, %145 : vector<8x128xf32>
      %cst_54 = arith.constant 2.000000e-01 : f32
      %147 = vector.broadcast %cst_54 : f32 to vector<8x128xf32>
      %148 = arith.addf %147, %146 : vector<8x128xf32>
      %149 = arith.mulf %141, %148 : vector<8x128xf32>
      %cst_55 = arith.constant -0.333333343 : f32
      %150 = vector.broadcast %cst_55 : f32 to vector<8x128xf32>
      %151 = arith.addf %150, %149 : vector<8x128xf32>
      %152 = arith.mulf %141, %151 : vector<8x128xf32>
      %cst_56 = arith.constant 1.000000e+00 : f32
      %153 = vector.broadcast %cst_56 : f32 to vector<8x128xf32>
      %154 = arith.addf %153, %152 : vector<8x128xf32>
      %155 = arith.mulf %140, %154 : vector<8x128xf32>
      %cst_57 = arith.constant 8.000000e+00 : f32
      %156 = vector.broadcast %cst_57 : f32 to vector<8x128xf32>
      %157 = arith.mulf %156, %155 : vector<8x128xf32>
      %158 = arith.subf %118, %157 : vector<8x128xf32>
      %159 = arith.mulf %158, %158 : vector<8x128xf32>
      %cst_58 = arith.constant 0.405284733 : f32
      %160 = vector.broadcast %cst_58 : f32 to vector<8x128xf32>
      %161 = arith.mulf %159, %160 : vector<8x128xf32>
      %cst_59 = arith.constant 1.000000e+00 : f32
      %162 = vector.broadcast %cst_59 : f32 to vector<8x128xf32>
      %163 = arith.addf %162, %161 : vector<8x128xf32>
      %164 = arith.subf %163, %62 : vector<8x128xf32>
      %165 = arith.divf %161, %164 : vector<8x128xf32>
      %166 = arith.mulf %165, %161 : vector<8x128xf32>
      %c0_60 = arith.constant 0 : index
      %c0_61 = arith.constant 0 : index
      %167 = vector.load %arg6[%c0_60, %c0_61] : memref<1x1xf32, #tpu.memory_space<vmem>>, vector<1x1xf32>
      %168 = vector.broadcast %167 : vector<1x1xf32> to vector<8x128xf32>
      %169 = arith.addf %168, %166 : vector<8x128xf32>
      %cst_62 = arith.constant 0.000000e+00 : f32
      %170 = vector.broadcast %cst_62 : f32 to vector<8x128xf32>
      %171 = arith.maximumf %169, %170 : vector<8x128xf32>
      %cst_63 = arith.constant 0.000000e+00 : f32
      %172 = vector.broadcast %cst_63 : f32 to vector<8x128xf32>
      %173 = arith.select %73, %171, %172 : vector<8x128xi1>, vector<8x128xf32>
      %c0_64 = arith.constant 0 : index
      %c0_65 = arith.constant 0 : index
      %174 = vector.load %arg5[%c0_64, %c0_65] : memref<1x1xf32, #tpu.memory_space<vmem>>, vector<1x1xf32>
      %175 = vector.shape_cast %173 : vector<8x128xf32> to vector<1x8x128xf32>
      %cst_66 = arith.constant dense<0.000000e+00> : vector<1xf32>
      %176 = vector.multi_reduction <add>, %175, %cst_66 [1, 2] : vector<1x8x128xf32> to vector<1xf32>
      %177 = vector.shape_cast %176 : vector<1xf32> to vector<1x1x1xf32>
      %178 = vector.extract %177[0, 0, 0] : f32 from vector<1x1x1xf32>
      %179 = vector.broadcast %178 : f32 to vector<1x1xf32>
      %180 = arith.addf %174, %179 : vector<1x1xf32>
      %c0_67 = arith.constant 0 : index
      %c0_68 = arith.constant 0 : index
      %181 = vector.load %arg5[%c0_67, %c0_68] : memref<1x1xf32, #tpu.memory_space<vmem>>, vector<1x1xf32>
      tpu.vector_store %arg5[%c0_67, %c0_68], %180 {strides = array<i32>} : memref<1x1xf32, #tpu.memory_space<vmem>>, vector<1x1xf32>,
    } else {
    }
    return
  }
  func.func @transform_0(%arg0: i32, %arg1: i32, %arg2: memref<1xi32, #tpu.memory_space<smem>>) -> (i32, i32, i32) {
    %c0_i32 = arith.constant 0 : i32
    %c0_i32_0 = arith.constant 0 : i32
    %c0_i32_1 = arith.constant 0 : i32
    return %c0_i32, %arg1, %c0_i32_0 : i32, i32, i32
  }
  func.func @transform_1(%arg0: i32, %arg1: i32, %arg2: memref<1xi32, #tpu.memory_space<smem>>) -> (i32, i32, i32) {
    %c0_i32 = arith.constant 0 : i32
    %c0_i32_0 = arith.constant 0 : i32
    %c0_i32_1 = arith.constant 0 : i32
    return %c0_i32, %arg1, %c0_i32_0 : i32, i32, i32
  }
  func.func @transform_2(%arg0: i32, %arg1: i32, %arg2: memref<1xi32, #tpu.memory_space<smem>>) -> (i32, i32) {
    %c0_i32 = arith.constant 0 : i32
    %c0_i32_0 = arith.constant 0 : i32
    %c0_i32_1 = arith.constant 0 : i32
    return %c0_i32, %c0_i32_0 : i32, i32
  }
}

</mosaic_0001>

<llo_original>
// kernel: tpu_custom_call.1
$region0: #{tpu_custom_call.1}
  #allocation0 [shape = 'u32[]', space=smem, size = 0x4, offset = 0x4, fixed_abs, tag = 'smem constant byte address 0x4 - core index']
  #allocation1 [shape = 'u32[144,128]{1,0:T(1,128)}', space=vmem, size = 0x12000, scoped, tag = 'internal scratch']
  #allocation2 [shape = 'f32[1,1]{1,0:T(1,128)}', space=vmem, size = 0x200, scoped, tag = 'scratch operand']
  #allocation3 [shape = 's32[1]{0}', space=sflag, size = 0x4, scoped, tag = 'scoped memory for tpu_custom_call.1']
  #allocation4 [shape = 's32[1]{0:T(128)S(6)}', space=smem, size = 0x200, scoped, tag = 'prefetched SMEM operand 0']
  %s0 = inlined_call_operand.<no memory space> [shape: s32[1], index: 0, kind: input, shape index: {}]
  %s1 = inlined_call_operand.hbm [shape: f32[4,16,128], index: 1, kind: input, shape index: {}]
  %s2 = inlined_call_operand.hbm [shape: f32[4,16,128], index: 2, kind: input, shape index: {}]
  %s3 = inlined_call_operand.hbm [shape: f32[1,1], index: 3, kind: output, shape index: {}]
  %s4 = sld [smem:[#allocation0]]
  $region61: #{tpu_custom_call.1} parent=0
    _
  %s6 = ssub.s32 1, %s4
  %s7 = scalar_select 0, %s6, %s4
  %8 = sst [smem:[#allocation4]] %s0
  $region1: #{tpu_custom_call.1} parent=0
    #allocation5 [shape = 'u8[32768]{0}', space=vmem, size = 0x8000, scoped, tag = 'input window, operand 1']
    #allocation6 [shape = 's32[2]{0}', space=sflag, size = 0x8, scoped, tag = 'scoped memory for tpu_custom_call.1']
    #allocation7 [shape = 's32[2]{0}', space=sflag, size = 0x8, scoped, tag = 'scoped memory for tpu_custom_call.1']
    #allocation8 [shape = 'u8[32768]{0}', space=vmem, size = 0x8000, scoped, tag = 'input window, operand 2']
    #allocation9 [shape = 's32[2]{0}', space=sflag, size = 0x8, scoped, tag = 'scoped memory for tpu_custom_call.1']
    #allocation10 [shape = 'u8[512]{0}', space=vmem, size = 0x400, scoped, tag = 'output window, operand 0, single buffered']
    %9 = vsyncpa [#allocation6], 0
    %s10 = scalar_lea.sflag [#allocation6], 1
    %11 = vsyncpa %s10, 0
    %12 = vsyncpa [#allocation9], 0
    %s13 = scalar_lea.sflag [#allocation9], 1
    %14 = vsyncpa %s13, 0
    %15 = vsyncpa [#allocation7], 0
    loop: start=0, step=1, limit=6
    $region2: #{tpu_custom_call.1} parent=1 // loop_pre_header
      _
    $region3: #{tpu_custom_call.1} parent=1 // loop_header
      %s17 = sphi 0, %s21
      %p18 = scmp.ge.s32.totalorder %s17, 6
      %s24 = sphi 0, %s36
      %s25 = sphi 0, %s32
      %s26 = sphi 0, %s24
      %s27 = sphi 0, %s25
      %s28 = sphi 0, %s26
      %s29 = sphi 0, %s27
      %s39 = sphi 0, %s41
      %s42 = sphi 0, %s39
      %s43 = sphi 0, %s42
      %s59 = sphi 0, %s43
      %s65 = sphi 0, %s67
      %s68 = sphi 0, %s65
      %s69 = sphi 0, %s68
      %s85 = sphi 0, %s69
      %s89 = sphi 0, %s89
      %s91 = sphi 0, %s89
      %s92 = sphi 0, %s91
      %s106 = sphi 0, %s92
    $region4: #{tpu_custom_call.1} parent=1 // loop_header_branch
      %20 = sbr.rel (%p18) target = $region8
    $region5: #{tpu_custom_call.1} parent=1 // loop_body
      %s22 = ssub.s32 %s17, 1
      %s23 = ssub.s32 %s17, 2
      %s30 = sadd.s32 1, %s25
      %p31 = scmp.ge.s32.totalorder %s30, 2
      %s32 = scalar_select %p31, 0, %s30
      %s33 = sadd.s32 1, %s24
      %s34 = scalar_select %p31, %s33, %s24
      %p35 = scmp.ge.s32.totalorder %s34, 2
      %s36 = scalar_select %p35, 0, %s34
      %s37 = ssub.s32 %s25, %s32
      %p38 = scmp.eq.s32.totalorder %s37, 0
      %s40 = sadd.s32 %s39, 1
      %s41 = scalar_select %p38, %s39, %s40
      %p44 = pneg %p38
      %p45 = scmp.eq.s32.totalorder %s17, 3
      %p46 = por %p44, %p45
      %p47 = scmp.ne.s32.totalorder %s39, %s42
      %p48 = scmp.eq.s32.totalorder %s17, 0
      %p49 = por %p47, %p48
      %p50 = scmp.ne.s32.totalorder %s39, %s42
      %p51 = scmp.eq.s32.totalorder %s22, 3
      %p52 = por %p50, %p51
      %p53 = scmp.ne.s32.totalorder %s42, %s43
      %p54 = scmp.eq.s32.totalorder %s22, 0
      %p55 = por %p53, %p54
      %p56 = scmp.ne.s32.totalorder %s42, %s43
      %p57 = scmp.eq.s32.totalorder %s23, 3
      %p58 = por %p56, %p57
      %p60 = scmp.ne.s32.totalorder %s43, %s59
      %p61 = scmp.eq.s32.totalorder %s23, 0
      %p62 = por %p60, %p61
      %s63 = ssub.s32 %s25, %s32
      %p64 = scmp.eq.s32.totalorder %s63, 0
      %s66 = sadd.s32 %s65, 1
      %s67 = scalar_select %p64, %s65, %s66
      %p70 = pneg %p64
      %p71 = scmp.eq.s32.totalorder %s17, 3
      %p72 = por %p70, %p71
      %p73 = scmp.ne.s32.totalorder %s65, %s68
      %p74 = scmp.eq.s32.totalorder %s17, 0
      %p75 = por %p73, %p74
      %p76 = scmp.ne.s32.totalorder %s65, %s68
      %p77 = scmp.eq.s32.totalorder %s22, 3
      %p78 = por %p76, %p77
      %p79 = scmp.ne.s32.totalorder %s68, %s69
      %p80 = scmp.eq.s32.totalorder %s22, 0
      %p81 = por %p79, %p80
      %p82 = scmp.ne.s32.totalorder %s68, %s69
      %p83 = scmp.eq.s32.totalorder %s23, 3
      %p84 = por %p82, %p83
      %p86 = scmp.ne.s32.totalorder %s69, %s85
      %p87 = scmp.eq.s32.totalorder %s23, 0
      %p88 = por %p86, %p87
      %s90 = sadd.s32 %s89, 1
      %p93 = scmp.eq.s32.totalorder %s17, 3
      %p94 = scmp.ne.s32.totalorder %s89, %s91
      %p95 = scmp.eq.s32.totalorder %s17, 0
      %p96 = por %p94, %p95
      %p97 = scmp.ne.s32.totalorder %s89, %s91
      %p98 = scmp.eq.s32.totalorder %s22, 3
      %p99 = por %p97, %p98
      %p100 = scmp.ne.s32.totalorder %s91, %s92
      %p101 = scmp.eq.s32.totalorder %s22, 0
      %p102 = por %p100, %p101
      %p103 = scmp.ne.s32.totalorder %s91, %s92
      %p104 = scmp.eq.s32.totalorder %s23, 3
      %p105 = por %p103, %p104
      %p107 = scmp.ne.s32.totalorder %s92, %s106
      %p108 = scmp.eq.s32.totalorder %s23, 0
      %p109 = por %p107, %p108
      %p110 = scmp.le.s32.totalorder 1, %s17
      %p111 = scmp.lt.s32.totalorder %s17, 5
      %p112 = pnand %p110, %p111
      %p113 = pneg %p112
      // Predicated region
      $region9: #{tpu_custom_call.1} parent=5 // pred_check
        _
      $region10: #{tpu_custom_call.1} parent=5 // pred_check_branch
        %115 = sbr.rel (%p112) target = $region12
      $region11: #{tpu_custom_call.1} parent=5 // pred_region
        %s116 = ssub.s32 %s17, 1
      $region12: #{tpu_custom_call.1} parent=5 // pred_fallthru
        _
      %p117 = scmp.lt.s32.totalorder %s17, 4
      // Predicated region
      $region13: #{tpu_custom_call.1} parent=5 // pred_check
        %p118 = pneg %p117
      $region14: #{tpu_custom_call.1} parent=5 // pred_check_branch
        %120 = sbr.rel (%p118) target = $region16
      $region15: #{tpu_custom_call.1} parent=5 // pred_region
        // Predicated region
        $region17: #{tpu_custom_call.1} parent=15 // pred_check
          %p121 = pneg %p49
        $region18: #{tpu_custom_call.1} parent=15 // pred_check_branch
          %123 = sbr.rel (%p121) target = $region20
        $region19: #{tpu_custom_call.1} parent=15 // pred_region
          %s124 = sand.u32 %s39, 1
          %s125 = scalar_lea.sflag [#allocation6], %s124
          %s126 = sand.u32 %s39, 1
          %s127 = smul.addr %s126, 32
          %s128 = scalar_lea.vmem [#allocation5], %s127
          %s130 = ssub.s32 512, 512
          %131 = vsyncadd %s125, %s130
          %s132 = smul.addr %s25, 128
          %s133 = scalar_lea.hbm %s1, %s132
          %s134 = sshll.u32 %s128, 4
          %s135 = int_to_ptr.vmem [resolvable:$true] %s134
          %140 = dma.hbm_to_vmem [thread:$0]  %s133, 512, %s135, %s125, 256, 128, 8
        $region20: #{tpu_custom_call.1} parent=15 // pred_fallthru
          _
        // Predicated region
        $region21: #{tpu_custom_call.1} parent=15 // pred_check
          %p141 = pneg %p75
        $region22: #{tpu_custom_call.1} parent=15 // pred_check_branch
          %143 = sbr.rel (%p141) target = $region24
        $region23: #{tpu_custom_call.1} parent=15 // pred_region
          %s144 = sand.u32 %s65, 1
          %s145 = scalar_lea.sflag [#allocation9], %s144
          %s146 = sand.u32 %s65, 1
          %s147 = smul.addr %s146, 32
          %s148 = scalar_lea.vmem [#allocation8], %s147
          %s150 = ssub.s32 512, 512
          %151 = vsyncadd %s145, %s150
          %s152 = smul.addr %s25, 128
          %s153 = scalar_lea.hbm %s2, %s152
          %s154 = sshll.u32 %s148, 4
          %s155 = int_to_ptr.vmem [resolvable:$true] %s154
          %160 = dma.hbm_to_vmem [thread:$0]  %s153, 512, %s155, %s145, 256, 128, 8
        $region24: #{tpu_custom_call.1} parent=15 // pred_fallthru
          _
      $region16: #{tpu_custom_call.1} parent=5 // pred_fallthru
        _
      %p161 = scmp.le.s32.totalorder 1, %s17
      %p162 = scmp.lt.s32.totalorder %s17, 5
      %p163 = pnand %p161, %p162
      %p164 = pneg %p163
      // Predicated region
      $region25: #{tpu_custom_call.1} parent=5 // pred_check
        _
      $region26: #{tpu_custom_call.1} parent=5 // pred_check_branch
        %166 = sbr.rel (%p163) target = $region28
      $region27: #{tpu_custom_call.1} parent=5 // pred_region
        %s167 = ssub.s32 %s17, 1
        %s168 = sand.u32 %s42, 1
        %s169 = scalar_lea.sflag [#allocation6], %s168
        %s170 = sand.u32 %s42, 1
        %s171 = smul.addr %s170, 32
        %s172 = scalar_lea.vmem [#allocation5], %s171
        // Predicated region
        $region29: #{tpu_custom_call.1} parent=27 // pred_check
          %p173 = pneg %p55
        $region30: #{tpu_custom_call.1} parent=27 // pred_check_branch
          %175 = sbr.rel (%p173) target = $region32
        $region31: #{tpu_custom_call.1} parent=27 // pred_region
          %176 = dma.done %s169, 512
        $region32: #{tpu_custom_call.1} parent=27 // pred_fallthru
          _
        %s177 = sand.u32 %s68, 1
        %s178 = scalar_lea.sflag [#allocation9], %s177
        %s179 = sand.u32 %s68, 1
        %s180 = smul.addr %s179, 32
        %s181 = scalar_lea.vmem [#allocation8], %s180
        // Predicated region
        $region33: #{tpu_custom_call.1} parent=27 // pred_check
          %p182 = pneg %p81
        $region34: #{tpu_custom_call.1} parent=27 // pred_check_branch
          %184 = sbr.rel (%p182) target = $region36
        $region35: #{tpu_custom_call.1} parent=27 // pred_region
          %185 = dma.done %s178, 512
        $region36: #{tpu_custom_call.1} parent=27 // pred_fallthru
          _
        %s186 = sand.u32 %s42, 1
        %s187 = scalar_lea.sflag [#allocation6], %s186
        %s188 = sand.u32 %s42, 1
        %s189 = smul.addr %s188, 32
        %s190 = scalar_lea.vmem [#allocation5], %s189
        %p191 = pneg %p55
        %p192 = pneg %p52
        %s193 = sand.u32 %s68, 1
        %s194 = scalar_lea.sflag [#allocation9], %s193
        %s195 = sand.u32 %s68, 1
        %s196 = smul.addr %s195, 32
        %s197 = scalar_lea.vmem [#allocation8], %s196
        %p198 = pneg %p81
        %p199 = pneg %p78
        %p200 = pneg %p102
        %p201 = pneg %p99
        %p202 = scmp.eq.s32.totalorder %s26, 0
        %p203 = scmp.eq.s32.totalorder %s27, 0
        %p204 = pnand %p202, %p203
        %p205 = pneg %p204
        // Predicated region
        $region37: #{tpu_custom_call.1} parent=27 // pred_check
          _
        $region38: #{tpu_custom_call.1} parent=27 // pred_check_branch
          %207 = sbr.rel (%p204) target = $region40
        $region39: #{tpu_custom_call.1} parent=27 // pred_region
          %vm208 = vcmask 0
          %209 = vst.msk [vmem:[#allocation2] sm:$0x1] %vm208, 0.0
          %210 = vst.msk [vmem:[#allocation10] sm:$0x1] %vm208, 0.0
        $region40: #{tpu_custom_call.1} parent=27 // pred_fallthru
          _
        %v211 = vld [vmem:[%s172] sm:$0xff]
        %s212 = scalar_lea.vmem %s172, 8 [#allocation5]
        %v213 = vld [vmem:[%s212] sm:$0xff]
        %s214 = scalar_lea.vmem %s172, 16 [#allocation5]
        %v215 = vld [vmem:[%s214] sm:$0xff]
        %s216 = scalar_lea.vmem %s172, 24 [#allocation5]
        %v217 = vld [vmem:[%s216] sm:$0xff]
        %v218 = vld [vmem:[%s181] sm:$0xff]
        %s219 = scalar_lea.vmem %s181, 8 [#allocation8]
        %v220 = vld [vmem:[%s219] sm:$0xff]
        %s221 = scalar_lea.vmem %s181, 16 [#allocation8]
        %v222 = vld [vmem:[%s221] sm:$0xff]
        %s223 = scalar_lea.vmem %s181, 24 [#allocation8]
        %v224 = vld [vmem:[%s223] sm:$0xff]
        %v225 = vmul.f32 %v215, 0.5
        %v226 = vadd.f32 %v211, %v225
        %v227 = vmul.f32 %v222, 0.5
        %v228 = vadd.f32 %v218, %v227
        %v229 = vmax.f32 %v226, %v228
        %v230 = vsub.f32 %v211, %v225
        %v231 = vsub.f32 %v218, %v227
        %v232 = vmin.f32 %v230, %v231
        %v233 = vmul.f32 %v217, 0.5
        %v234 = vadd.f32 %v213, %v233
        %v235 = vmul.f32 %v224, 0.5
        %v236 = vadd.f32 %v220, %v235
        %v237 = vmax.f32 %v234, %v236
        %v238 = vsub.f32 %v213, %v233
        %v239 = vsub.f32 %v220, %v235
        %v240 = vmin.f32 %v238, %v239
        %v241 = vadd.f32 %v215, %v222
        %v242 = vsub.f32 %v229, %v232
        %v243 = vsub.f32 %v241, %v242
        %v244 = vadd.f32 %v217, %v224
        %v245 = vsub.f32 %v237, %v240
        %v246 = vsub.f32 %v244, %v245
        %v247 = vmul.f32 %v243, %v246
        %v248 = vmax.f32 %v247, 0.0
        %v249 = vmul.f32 %v215, %v217
        %v250 = vmul.f32 %v222, %v224
        %v251 = vadd.f32 %v249, %v250
        %v252 = vsub.f32 %v251, %v248
        %v253 = vrcp.pop %v252
        %v254 = vmul.f32 %v248, %v253
        %s255 = smul.u32 %s27, 1024
        %v256 = vlaneseq
        %v257 = vshrl.u32 %v256, 7
        %v258 = vlaneseq
        %v259 = vand.u32 %v258, 127
        %v260 = vmul.u32 %v257, 128
        %v261 = vstv %s255
        %v262 = vadd.s32 %v261, %v260
        %v263 = vadd.s32 %v262, %v259
        %s264 = sld [smem:[#allocation4]]
        %v265 = vstv %s264
        %vm266 = vcmp.lt.s32.totalorder %v263, %v265
        // Predicated region
        $region41: #{tpu_custom_call.1} parent=27 // pred_check
          %p267 = pneg %p202
        $region42: #{tpu_custom_call.1} parent=27 // pred_check_branch
          %269 = sbr.rel (%p267) target = $region44
        $region43: #{tpu_custom_call.1} parent=27 // pred_region
          %v270 = vmul.f32 %v242, %v245
          %v271 = vsub.f32 %v211, %v218
          %v272 = vsub.f32 %v213, %v220
          %v273 = vmul.f32 %v271, %v271
          %v274 = vmul.f32 %v272, %v272
          %v275 = vadd.f32 %v273, %v274
          %v276 = vmul.f32 %v270, %v270
          %v277 = vrcp.pop %v276
          %v278 = vmul.f32 %v275, %v277
          %v279 = vsub.f32 1.0, %v254
          %v280 = vadd.f32 %v279, %v278
          %v281 = vmax.f32 %v280, 0.0
          %v282 = vsel %vm266, %v281, 0.0
          %v283 = vld [vmem:[#allocation2] sm:$0x1]
          %284 = vadd.xlane.f32.xlu0 %v282
          %v285 = vpop.xlane.xlu0 %284
          %v286 = vrot.slane %v285, 4
          %v287 = vadd.f32 %v285, %v286
          %v288 = vrot.slane %v287, 2
          %v289 = vadd.f32 %v287, %v288
          %v290 = vrot.slane %v289, 1
          %v291 = vadd.f32 %v289, %v290
          %s292 = vtos %v291
          %v293 = vstv %s292
          %v294 = vadd.f32 %v283, %v293
          %vm295 = vcmask 0
          %296 = vst.msk [vmem:[#allocation2] sm:$0x1] %vm295, %v294
        $region44: #{tpu_custom_call.1} parent=27 // pred_fallthru
          _
        %p297 = scmp.eq.s32.totalorder %s26, 1
        // Predicated region
        $region45: #{tpu_custom_call.1} parent=27 // pred_check
          %p298 = pneg %p297
        $region46: #{tpu_custom_call.1} parent=27 // pred_check_branch
          %300 = sbr.rel (%p298) target = $region48
        $region47: #{tpu_custom_call.1} parent=27 // pred_region
          %v301 = vrcp.pop %v224
          %v302 = vmul.f32 %v222, %v301
          %v303 = vmul.f32 %v302, %v302
          %v304 = vadd.f32 %v303, 1.0
          %v305 = vrsqrt.pop %v304
          %v306 = vmul.f32 %v304, %v305
          %vm307 = vcmp.eq.f32.partialorder %v304, inf
          %v308 = vsel %vm307, %v304, %v306
          %vm309 = vcmp.eq.f32.partialorder %v304, 0.0
          %v310 = vand.u32 %v304, 2147483648
          %v311 = vsel %vm309, %v310, %v308
          %v312 = vadd.f32 %v311, 1.0
          %v313 = vrcp.pop %v312
          %v314 = vmul.f32 %v302, %v313
          %v315 = vmul.f32 %v314, %v314
          %v316 = vadd.f32 %v315, 1.0
          %v317 = vrsqrt.pop %v316
          %v318 = vmul.f32 %v316, %v317
          %vm319 = vcmp.eq.f32.partialorder %v316, inf
          %v320 = vsel %vm319, %v316, %v318
          %vm321 = vcmp.eq.f32.partialorder %v316, 0.0
          %v322 = vand.u32 %v316, 2147483648
          %v323 = vsel %vm321, %v322, %v320
          %v324 = vadd.f32 %v323, 1.0
          %v325 = vrcp.pop %v324
          %v326 = vmul.f32 %v314, %v325
          %v327 = vmul.f32 %v326, %v326
          %v328 = vadd.f32 %v327, 1.0
          %v329 = vrsqrt.pop %v328
          %v330 = vmul.f32 %v328, %v329
          %vm331 = vcmp.eq.f32.partialorder %v328, inf
          %v332 = vsel %vm331, %v328, %v330
          %vm333 = vcmp.eq.f32.partialorder %v328, 0.0
          %v334 = vand.u32 %v328, 2147483648
          %v335 = vsel %vm333, %v334, %v332
          %v336 = vadd.f32 %v335, 1.0
          %v337 = vrcp.pop %v336
          %v338 = vmul.f32 %v326, %v337
          %v339 = vmul.f32 %v338, %v338
          %v340 = vmul.f32 %v339, 0.11111111
          %v341 = vadd.f32 %v340, -0.14285715
          %v342 = vmul.f32 %v339, %v341
          %v343 = vadd.f32 %v342, 0.2
          %v344 = vmul.f32 %v339, %v343
          %v345 = vadd.f32 %v344, -0.33333334
          %v346 = vmul.f32 %v339, %v345
          %v347 = vadd.f32 %v346, 1.0
          %v348 = vmul.f32 %v338, %v347
          %v349 = vmul.f32 %v348, 8.0
          %v350 = vrcp.pop %v217
          %v351 = vmul.f32 %v215, %v350
          %v352 = vmul.f32 %v351, %v351
          %v353 = vadd.f32 %v352, 1.0
          %v354 = vrsqrt.pop %v353
          %v355 = vmul.f32 %v353, %v354
          %vm356 = vcmp.eq.f32.partialorder %v353, inf
          %v357 = vsel %vm356, %v353, %v355
          %vm358 = vcmp.eq.f32.partialorder %v353, 0.0
          %v359 = vand.u32 %v353, 2147483648
          %v360 = vsel %vm358, %v359, %v357
          %v361 = vadd.f32 %v360, 1.0
          %v362 = vrcp.pop %v361
          %v363 = vmul.f32 %v351, %v362
          %v364 = vmul.f32 %v363, %v363
          %v365 = vadd.f32 %v364, 1.0
          %v366 = vrsqrt.pop %v365
          %v367 = vmul.f32 %v365, %v366
          %vm368 = vcmp.eq.f32.partialorder %v365, inf
          %v369 = vsel %vm368, %v365, %v367
          %vm370 = vcmp.eq.f32.partialorder %v365, 0.0
          %v371 = vand.u32 %v365, 2147483648
          %v372 = vsel %vm370, %v371, %v369
          %v373 = vadd.f32 %v372, 1.0
          %v374 = vrcp.pop %v373
          %v375 = vmul.f32 %v363, %v374
          %v376 = vmul.f32 %v375, %v375
          %v377 = vadd.f32 %v376, 1.0
          %v378 = vrsqrt.pop %v377
          %v379 = vmul.f32 %v377, %v378
          %vm380 = vcmp.eq.f32.partialorder %v377, inf
          %v381 = vsel %vm380, %v377, %v379
          %vm382 = vcmp.eq.f32.partialorder %v377, 0.0
          %v383 = vand.u32 %v377, 2147483648
          %v384 = vsel %vm382, %v383, %v381
          %v385 = vadd.f32 %v384, 1.0
          %v386 = vrcp.pop %v385
          %v387 = vmul.f32 %v375, %v386
          %v388 = vmul.f32 %v387, %v387
          %v389 = vmul.f32 %v388, 0.11111111
          %v390 = vadd.f32 %v389, -0.14285715
          %v391 = vmul.f32 %v388, %v390
          %v392 = vadd.f32 %v391, 0.2
          %v393 = vmul.f32 %v388, %v392
          %v394 = vadd.f32 %v393, -0.33333334
          %v395 = vmul.f32 %v388, %v394
          %v396 = vadd.f32 %v395, 1.0
          %v397 = vmul.f32 %v387, %v396
          %v398 = vmul.f32 %v397, 8.0
          %v399 = vsub.f32 %v349, %v398
          %v400 = vmul.f32 %v399, %v399
          %v401 = vmul.f32 %v400, 0.40528473
          %v402 = vadd.f32 %v401, 1.0
          %v403 = vsub.f32 %v402, %v254
          %v404 = vrcp.pop %v403
          %v405 = vmul.f32 %v401, %v404
          %v406 = vmul.f32 %v405, %v401
          %v407 = vld [vmem:[#allocation2] sm:$0x1]
          %v409 = vlaneseq
          %v410 = vshrl.u32 %v409, 7
          %v411 = vsub.s32 0, %v410
          %v412 = vrot.slane %v407, %v411
          %413 = vset.pattern.permute.xlu0 0
          %414 = vperm.xlu0 %413, %v412
          %v415 = vpop.permute.xlu0 %414
          %v417 = vadd.f32 %v415, %v406
          %v418 = vmax.f32 %v417, 0.0
          %v419 = vsel %vm266, %v418, 0.0
          %v420 = vld [vmem:[#allocation10] sm:$0x1]
          %421 = vadd.xlane.f32.xlu0 %v419
          %v422 = vpop.xlane.xlu0 %421
          %v423 = vrot.slane %v422, 4
          %v424 = vadd.f32 %v422, %v423
          %v425 = vrot.slane %v424, 2
          %v426 = vadd.f32 %v424, %v425
          %v427 = vrot.slane %v426, 1
          %v428 = vadd.f32 %v426, %v427
          %s429 = vtos %v428
          %v430 = vstv %s429
          %v431 = vadd.f32 %v420, %v430
          %vm432 = vcmask 0
          %433 = vst.msk [vmem:[#allocation10] sm:$0x1] %vm432, %v431
        $region48: #{tpu_custom_call.1} parent=27 // pred_fallthru
          _
        // Predicated region
        $region49: #{tpu_custom_call.1} parent=27 // pred_check
          %p434 = pneg %p99
        $region50: #{tpu_custom_call.1} parent=27 // pred_check_branch
          %436 = sbr.rel (%p434) target = $region52
        $region51: #{tpu_custom_call.1} parent=27 // pred_region
          %s438 = ssub.s32 16, 16
          %439 = vsyncadd [#allocation7], %s438
          %s441 = sshll.u32 [#allocation10], 4
          %s442 = int_to_ptr.vmem [resolvable:$true] %s441
          %444 = dma.vmem_to_hbm [thread:$0]  %s442, 16, %s3, [#allocation7]
        $region52: #{tpu_custom_call.1} parent=27 // pred_fallthru
          _
        // Predicated region
        $region53: #{tpu_custom_call.1} parent=27 // pred_check
          %p445 = pneg %p99
        $region54: #{tpu_custom_call.1} parent=27 // pred_check_branch
          %447 = sbr.rel (%p445) target = $region56
        $region55: #{tpu_custom_call.1} parent=27 // pred_region
          %448 = dma.done [#allocation7], 16
        $region56: #{tpu_custom_call.1} parent=27 // pred_fallthru
          _
      $region28: #{tpu_custom_call.1} parent=5 // pred_fallthru
        _
      %p449 = scmp.le.s32.totalorder 2, %s17
      // Predicated region
      $region57: #{tpu_custom_call.1} parent=5 // pred_check
        %p450 = pneg %p449
      $region58: #{tpu_custom_call.1} parent=5 // pred_check_branch
        %452 = sbr.rel (%p450) target = $region60
      $region59: #{tpu_custom_call.1} parent=5 // pred_region
        %s453 = ssub.s32 %s17, 2
      $region60: #{tpu_custom_call.1} parent=5 // pred_fallthru
        _
    $region6: #{tpu_custom_call.1} parent=1 // loop_footer
      %s21 = sadd.s32 1, %s17
    $region7: #{tpu_custom_call.1} parent=1 // loop_footer_branch
      %16 = sbr.rel target = $region3
    $region8: #{tpu_custom_call.1} parent=1 // loop_exit
      _
    %454 = vsyncpa [#allocation6], 1
    %s455 = scalar_lea.sflag [#allocation6], 1
    %456 = vsyncpa %s455, 1
    %457 = vsyncpa [#allocation9], 1
    %s458 = scalar_lea.sflag [#allocation9], 1
    %459 = vsyncpa %s458, 1
    %460 = vsyncpa [#allocation7], 1
    %s461 = scalar_lea.sflag [#allocation7], 1
    %462 = vsyncpa %s461, 1

</llo_original>
